<compile_context>
chip_gen: v7x
topology: tpu7x:2x2x1
jax: 0.10.0
libtpu: 0.0.40
codegen_flags: <defaults>
</compile_context>

<pallas_src>
import jax
import jax.numpy as jnp
from jax import lax
from jax.experimental import pallas as pl
from jax.experimental.pallas import tpu as pltpu

LANE = 128
TB = 16          # batch rows per grid step (bf16 sublane pack, aligned slices)


def _round_up(x, m):
    return (x + m - 1) // m * m


def _pad_to(a, shape):
    return jnp.pad(a, [(0, t - s) for s, t in zip(a.shape, shape)])


# -----------------------------------------------------------------------------
# Kernel factory (L1, tb are static Python ints baked into the kernel).
#   x_ref   : (1, L1*tb, C8p) bf16   im2col'd conv1 patches, l-major rows
#   w1_ref  : (C8p, Kp)       bf16   conv1 weight (row = c*8 + tap)
#   b1_ref  : (1, Kp)         f32
#   w2_ref  : (3, Kp, Kp)     bf16   conv2 per-tap weights (in, out)
#   b2_ref  : (1, Kp)         f32
#   w3_ref  : (L1, Kp, Hp)    bf16   fc1 weight with channel-major flatten folded
#   b3_ref  : (1, Hp)         f32
#   w4_ref  : (Hp, Kp)        bf16   fc2 weight (transposed)
#   b4_ref  : (1, Kp)         f32
#   out_ref : (tb, Kp)        f32
#   h1p_ref : ((L1+2)*tb, Kp) bf16   zero-halo'd conv1 output scratch
# -----------------------------------------------------------------------------
def _make_kernel(L1, tb):
    def kernel(x_ref, w1_ref, b1_ref, w2_ref, b2_ref, w3_ref, b3_ref,
               w4_ref, b4_ref, out_ref, h1p_ref):
        bf16 = jnp.bfloat16
        Kp = w2_ref.shape[1]
        Hp = w3_ref.shape[2]

        # ---- conv1: one big matmul on the wrapper-built im2col rows.
        x = x_ref[0]                                           # (L1*tb, C8p)
        h1 = jnp.dot(x, w1_ref[...], preferred_element_type=jnp.float32)
        h1 = jnp.maximum(h1 + b1_ref[...], 0.0)                # (L1*tb, Kp) f32

        # ---- conv2: zero-halo'd l-major scratch + 3 accumulated per-tap dots.
        @pl.when(pl.program_id(0) == 0)
        def _zero_halo():   # halo rows written once; nothing else touches them
            h1p_ref[0:tb, :] = jnp.zeros((tb, Kp), bf16)
            h1p_ref[(L1 + 1) * tb:(L1 + 2) * tb, :] = jnp.zeros((tb, Kp), bf16)

        h1p_ref[tb:(L1 + 1) * tb, :] = h1.astype(bf16)

        h2 = jnp.dot(h1p_ref[0:L1 * tb, :], w2_ref[0],
                     preferred_element_type=jnp.float32)
        for t in (1, 2):
            h2 = h2 + jnp.dot(h1p_ref[t * tb:(L1 + t) * tb, :], w2_ref[t],
                              preferred_element_type=jnp.float32)
        h2 = jnp.maximum(h2 + b2_ref[...], 0.0)                # (L1*tb, Kp) f32
        h2 = h2.astype(bf16)

        # ---- flatten + fc1: contract (l, k) as L1 accumulated, aligned dots.
        # TODO(synk): tile this over an "arbitrary" grid axis (f32 accumulator)
        # once w3 no longer fits whole-resident in VMEM (first on v7x, 64 MiB).
        h3 = jnp.dot(h2[0:tb, :], w3_ref[0], preferred_element_type=jnp.float32)
        for l in range(1, L1):
            h3 = h3 + jnp.dot(h2[l * tb:(l + 1) * tb, :], w3_ref[l],
                              preferred_element_type=jnp.float32)
        h3 = jnp.maximum(h3 + b3_ref[...], 0.0)                # (tb, Hp) f32

        # ---- fc2 + tanh: full-slab unmasked store.
        out = jnp.dot(h3.astype(bf16), w4_ref[...],
                      preferred_element_type=jnp.float32)
        out_ref[...] = jnp.tanh(out + b4_ref[...]).astype(out_ref.dtype)

    return kernel


# -----------------------------------------------------------------------------
# Wrapper: weight/input re-layout (glue, pure XLA) + pallas_call.
# -----------------------------------------------------------------------------
def encoder_aeris_forward(state, params, tb=TB):
    """state: (B, C, W) float32.  Returns features (B, K)."""
    B, C, W = state.shape
    assert W % 4 == 0, "width must be a multiple of 4 (conv1 stride)"
    K = params["W1"].shape[0]          # forward_model_kernels_count
    L1 = W // 4                        # conv1/conv2 output length
    H = params["W3"].shape[0]          # fc_count // 2

    Kp = _round_up(K, LANE)
    Hp = _round_up(H, LANE)
    C8 = C * 8
    C8p = _round_up(C8, LANE)
    f32, bf16 = jnp.float32, jnp.bfloat16

    # Input im2col (wrapper side): contraction padded once to C8p, cast to bf16.
    xpad = jnp.pad(state.astype(f32), ((0, 0), (0, 0), (2, 2)))   # (B, C, W+4)
    xblk = xpad.reshape(B, C, L1 + 1, 4)
    patches = jnp.concatenate([xblk[:, :, :L1, :], xblk[:, :, 1:, :]], axis=-1)
    patches = patches.transpose(0, 2, 1, 3).reshape(B, L1, C8)    # row = c*8+t
    Bp = _round_up(B, tb)
    G = Bp // tb
    patches = _pad_to(patches, (Bp, L1, C8p)).astype(bf16)
    # Group batch into tiles of tb rows, l-major inside a tile -> aligned slices.
    xg = patches.reshape(G, tb, L1, C8p).transpose(0, 2, 1, 3).reshape(
        G, L1 * tb, C8p)

    # Conv1 weight (K, C, 8) -> (C8p, Kp), row index c*8 + tap.
    W1 = params["W1"].astype(f32)
    w1 = _pad_to(W1.reshape(K, C8).T, (C8p, Kp)).astype(bf16)
    b1 = _pad_to(params["b1"].reshape(1, K).astype(f32), (1, Kp))

    # Conv2 weight (Kout, Kin, 3) -> per-tap (Kp_in, Kp_out) stacked as (3, Kp, Kp).
    w2 = _pad_to(jnp.transpose(params["W2"].astype(f32), (2, 1, 0)),
                 (3, Kp, Kp)).astype(bf16)
    b2 = _pad_to(params["b2"].reshape(1, K).astype(f32), (1, Kp))

    # FC1 weight (H, K*L1): fold PyTorch's channel-major flatten so that
    # w3[l, k, h] multiplies conv2 output at position l, channel k.
    W3 = params["W3"].astype(f32)
    w3 = jnp.transpose(W3.T.reshape(K, L1, H), (1, 0, 2))         # (L1, K, H)
    w3 = _pad_to(w3, (L1, Kp, Hp)).astype(bf16)
    b3 = _pad_to(params["b3"].reshape(1, H).astype(f32), (1, Hp))

    # FC2 weight (K, H) -> (Hp, Kp).
    w4 = _pad_to(params["W4"].astype(f32).T, (Hp, Kp)).astype(bf16)
    b4 = _pad_to(params["b4"].reshape(1, K).astype(f32), (1, Kp))

    vmem = pltpu.MemorySpace.VMEM
    # Whole-array VMEM residents: fetched once, not part of the streamed
    # pipeline, so they are not double-buffered.
    resident = pl.BlockSpec(memory_space=vmem)

    weight_bytes = sum(int(a.size) * a.dtype.itemsize
                       for a in (w1, b1, w2, b2, w3, b3, w4, b4))
    x_block_bytes = L1 * tb * C8p * 2
    out_block_bytes = tb * Kp * 4
    scratch_bytes = (L1 + 2) * tb * Kp * 2
    resident_bytes = (weight_bytes + 2 * x_block_bytes + 2 * out_block_bytes
                      + scratch_bytes)
    vmem_limit = int(min(100 * 2**20, max(32 * 2**20, 2 * resident_bytes)))

    flops = (2 * Bp * L1 * C8 * K + 2 * Bp * L1 * (3 * K) * K
             + 2 * Bp * (K * L1) * H + 2 * Bp * H * K)
    bytes_accessed = int(xg.size) * 2 + weight_bytes + Bp * Kp * 4

    out = pl.pallas_call(
        _make_kernel(L1, tb),
        out_shape=jax.ShapeDtypeStruct((Bp, Kp), jnp.float32),
        grid=(G,),
        in_specs=[pl.BlockSpec((1, L1 * tb, C8p), lambda i: (i, 0, 0)),
                  resident, resident, resident, resident,
                  resident, resident, resident, resident],
        out_specs=pl.BlockSpec((tb, Kp), lambda i: (i, 0)),
        scratch_shapes=[pltpu.VMEM(((L1 + 2) * tb, Kp), jnp.bfloat16)],
        compiler_params=pltpu.CompilerParams(
            dimension_semantics=("parallel",),
            vmem_limit_bytes=vmem_limit),
        cost_estimate=pl.CostEstimate(flops=int(flops),
                                      transcendentals=int(Bp * Kp),
                                      bytes_accessed=int(bytes_accessed)),
    )(xg, w1, b1, w2, b2, w3, b3, w4, b4)

    return out[:B, :K]


# -----------------------------------------------------------------------------
# Pure-JAX f32 reference (lax conv) for correctness checking.
# -----------------------------------------------------------------------------
def reference_forward(state, params):
    B = state.shape[0]
    y = lax.conv_general_dilated(state, params["W1"], window_strides=(4,),
                                 padding=[(2, 2)],
                                 dimension_numbers=("NCH", "OIH", "NCH"))
    y = jnp.maximum(y + params["b1"][None, :, None], 0.0)
    y = lax.conv_general_dilated(y, params["W2"], window_strides=(1,),
                                 padding=[(1, 1)],
                                 dimension_numbers=("NCH", "OIH", "NCH"))
    y = jnp.maximum(y + params["b2"][None, :, None], 0.0)
    flat = y.reshape(B, -1)                                  # channel-major
    h = jnp.maximum(flat @ params["W3"].T + params["b3"], 0.0)
    return jnp.tanh(h @ params["W4"].T + params["b4"])


# -----------------------------------------------------------------------------
# Deterministic parameter init (xavier-uniform weights, small uniform biases).
# -----------------------------------------------------------------------------
def xavier_uniform(key, shape, fan_in, fan_out):
    bound = (6.0 / (fan_in + fan_out)) ** 0.5
    return jax.random.uniform(key, shape, jnp.float32, -bound, bound)


def init_params(key, channels, width, kernels_count):
    K = kernels_count
    fc_count = K * width // 4
    H = fc_count // 2
    ks = jax.random.split(key, 8)
    return {
        # Conv1d(channels, K, kernel_size=8, stride=4, padding=2)
        "W1": xavier_uniform(ks[0], (K, channels, 8), channels * 8, K * 8),
        "b1": jax.random.uniform(ks[1], (K,), jnp.float32, -0.05, 0.05),
        # Conv1d(K, K, kernel_size=3, stride=1, padding=1)
        "W2": xavier_uniform(ks[2], (K, K, 3), K * 3, K * 3),
        "b2": jax.random.uniform(ks[3], (K,), jnp.float32, -0.05, 0.05),
        # Linear(fc_count, fc_count // 2)
        "W3": xavier_uniform(ks[4], (H, fc_count), fc_count, H),
        "b3": jax.random.uniform(ks[5], (H,), jnp.float32, -0.05, 0.05),
        # Linear(fc_count // 2, K)
        "W4": xavier_uniform(ks[6], (K, H), H, K),
        "b4": jax.random.uniform(ks[7], (K,), jnp.float32, -0.05, 0.05),
    }


if __name__ == "__main__":
    # Small shapes consistent with the module:
    #   input_shape = (channels=4, width=16), forward_model_kernels_count = 8
    B, C, W, K = 2, 4, 16, 8

    key = jax.random.PRNGKey(0)
    pkey, xkey = jax.random.split(key)
    params = init_params(pkey, C, W, K)
    state = jax.random.normal(xkey, (B, C, W), jnp.float32)

    out = jax.jit(encoder_aeris_forward)(state, params)
    out = jax.block_until_ready(out)

    ref = jax.block_until_ready(reference_forward(state, params))
    assert out.shape == (B, K), out.shape
    # bf16 matmuls vs f32 reference -> loosened tolerance (structural bugs
    # would give O(1) errors; bf16 rounding is well below 3e-2 here).
    assert jnp.allclose(out, ref, atol=3e-2, rtol=0.0), (out, ref)

    print("KERNEL_OK")
</pallas_src>

<mosaic_0001>
module attributes {stable_mosaic.version = 11 : i64} {
  func.func @kernel(%arg0: i32, %arg1: memref<1x64x128xbf16, #tpu.memory_space<vmem>>, %arg2: memref<128x128xbf16, #tpu.memory_space<vmem>>, %arg3: memref<1x128xf32, #tpu.memory_space<vmem>>, %arg4: memref<3x128x128xbf16, #tpu.memory_space<vmem>>, %arg5: memref<1x128xf32, #tpu.memory_space<vmem>>, %arg6: memref<4x128x128xbf16, #tpu.memory_space<vmem>>, %arg7: memref<1x128xf32, #tpu.memory_space<vmem>>, %arg8: memref<128x128xbf16, #tpu.memory_space<vmem>>, %arg9: memref<1x128xf32, #tpu.memory_space<vmem>>, %arg10: memref<16x128xf32, #tpu.memory_space<vmem>>, %arg11: memref<96x128xbf16, #tpu.memory_space<vmem>>) attributes {dimension_semantics = [#tpu.dimension_semantics<parallel>], iteration_bounds = array<i64: 1>, scalar_prefetch = 0 : i64, scratch_operands = 1 : i64, tpu.core_type = #tpu.core_type<tc>, window_params = [{transform_indices = @transform_0, window_bounds = array<i64: 1, 64, 128>}, {pipeline_mode = #tpu.pipeline_mode<synchronous>, transform_indices = @transform_1, window_bounds = array<i64: 128, 128>}, {pipeline_mode = #tpu.pipeline_mode<synchronous>, transform_indices = @transform_2, window_bounds = array<i64: 1, 128>}, {pipeline_mode = #tpu.pipeline_mode<synchronous>, transform_indices = @transform_3, window_bounds = array<i64: 3, 128, 128>}, {pipeline_mode = #tpu.pipeline_mode<synchronous>, transform_indices = @transform_4, window_bounds = array<i64: 1, 128>}, {pipeline_mode = #tpu.pipeline_mode<synchronous>, transform_indices = @transform_5, window_bounds = array<i64: 4, 128, 128>}, {pipeline_mode = #tpu.pipeline_mode<synchronous>, transform_indices = @transform_6, window_bounds = array<i64: 1, 128>}, {pipeline_mode = #tpu.pipeline_mode<synchronous>, transform_indices = @transform_7, window_bounds = array<i64: 128, 128>}, {pipeline_mode = #tpu.pipeline_mode<synchronous>, transform_indices = @transform_8, window_bounds = array<i64: 1, 128>}, {transform_indices = @transform_9, window_bounds = array<i64: 16, 128>}]} {
    %c0 = arith.constant 0 : index
    %c0_0 = arith.constant 0 : index
    %c0_1 = arith.constant 0 : index
    %0 = vector.load %arg1[%c0, %c0_0, %c0_1] : memref<1x64x128xbf16, #tpu.memory_space<vmem>>, vector<1x64x128xbf16>
    %1 = vector.shape_cast %0 : vector<1x64x128xbf16> to vector<64x128xbf16>
    %c0_2 = arith.constant 0 : index
    %c0_3 = arith.constant 0 : index
    %2 = vector.load %arg2[%c0_2, %c0_3] : memref<128x128xbf16, #tpu.memory_space<vmem>>, vector<128x128xbf16>
    %cst = arith.constant dense<0.000000e+00> : vector<64x128xf32>
    %3 = tpu.matmul %1, %2, %cst {dimension_numbers = #tpu.dot_dimension_numbers<[1], [0], [0], [1], [0, 0, 1, 1], [], []>} : vector<64x128xbf16>, vector<128x128xbf16>, vector<64x128xf32> -> vector<64x128xf32>
    %c0_4 = arith.constant 0 : index
    %c0_5 = arith.constant 0 : index
    %4 = vector.load %arg3[%c0_4, %c0_5] : memref<1x128xf32, #tpu.memory_space<vmem>>, vector<1x128xf32>
    %5 = vector.broadcast %4 : vector<1x128xf32> to vector<64x128xf32>
    %6 = arith.addf %3, %5 : vector<64x128xf32>
    %cst_6 = arith.constant 0.000000e+00 : f32
    %7 = vector.broadcast %cst_6 : f32 to vector<64x128xf32>
    %8 = arith.maximumf %6, %7 : vector<64x128xf32>
    %c0_i32 = arith.constant 0 : i32
    %9 = arith.cmpi eq, %arg0, %c0_i32 : i32
    %10 = arith.extui %9 : i1 to i32
    %c0_i32_7 = arith.constant 0 : i32
    %11 = arith.cmpi ne, %10, %c0_i32_7 : i32
    scf.if %11 {
      %cst_52 = arith.constant 0.000000e+00 : bf16
      %66 = vector.broadcast %cst_52 : bf16 to vector<16x128xbf16>
      %c0_53 = arith.constant 0 : index
      %c0_54 = arith.constant 0 : index
      %67 = vector.load %arg11[%c0_53, %c0_54] : memref<96x128xbf16, #tpu.memory_space<vmem>>, vector<16x128xbf16>
      tpu.vector_store %arg11[%c0_53, %c0_54], %66 {strides = array<i32>} : memref<96x128xbf16, #tpu.memory_space<vmem>>, vector<16x128xbf16>,
      %cst_55 = arith.constant 0.000000e+00 : bf16
      %68 = vector.broadcast %cst_55 : bf16 to vector<16x128xbf16>
      %c80 = arith.constant 80 : index
      %c0_56 = arith.constant 0 : index
      %69 = vector.load %arg11[%c80, %c0_56] : memref<96x128xbf16, #tpu.memory_space<vmem>>, vector<16x128xbf16>
      tpu.vector_store %arg11[%c80, %c0_56], %68 {strides = array<i32>} : memref<96x128xbf16, #tpu.memory_space<vmem>>, vector<16x128xbf16>,
    } else {
    }
    %12 = arith.truncf %8 : vector<64x128xf32> to vector<64x128xbf16>
    %c16 = arith.constant 16 : index
    %c0_8 = arith.constant 0 : index
    %13 = vector.load %arg11[%c16, %c0_8] : memref<96x128xbf16, #tpu.memory_space<vmem>>, vector<64x128xbf16>
    tpu.vector_store %arg11[%c16, %c0_8], %12 {strides = array<i32>} : memref<96x128xbf16, #tpu.memory_space<vmem>>, vector<64x128xbf16>,
    %c0_9 = arith.constant 0 : index
    %c0_10 = arith.constant 0 : index
    %14 = vector.load %arg11[%c0_9, %c0_10] : memref<96x128xbf16, #tpu.memory_space<vmem>>, vector<64x128xbf16>
    %c0_11 = arith.constant 0 : index
    %c0_12 = arith.constant 0 : index
    %c0_13 = arith.constant 0 : index
    %15 = vector.load %arg4[%c0_11, %c0_12, %c0_13] : memref<3x128x128xbf16, #tpu.memory_space<vmem>>, vector<1x128x128xbf16>
    %16 = vector.shape_cast %15 : vector<1x128x128xbf16> to vector<128x128xbf16>
    %cst_14 = arith.constant dense<0.000000e+00> : vector<64x128xf32>
    %17 = tpu.matmul %14, %16, %cst_14 {dimension_numbers = #tpu.dot_dimension_numbers<[1], [0], [0], [1], [0, 0, 1, 1], [], []>} : vector<64x128xbf16>, vector<128x128xbf16>, vector<64x128xf32> -> vector<64x128xf32>
    %c16_15 = arith.constant 16 : index
    %c0_16 = arith.constant 0 : index
    %18 = vector.load %arg11[%c16_15, %c0_16] : memref<96x128xbf16, #tpu.memory_space<vmem>>, vector<64x128xbf16>
    %c1 = arith.constant 1 : index
    %c0_17 = arith.constant 0 : index
    %c0_18 = arith.constant 0 : index
    %19 = vector.load %arg4[%c1, %c0_17, %c0_18] : memref<3x128x128xbf16, #tpu.memory_space<vmem>>, vector<1x128x128xbf16>
    %20 = vector.shape_cast %19 : vector<1x128x128xbf16> to vector<128x128xbf16>
    %cst_19 = arith.constant dense<0.000000e+00> : vector<64x128xf32>
    %21 = tpu.matmul %18, %20, %cst_19 {dimension_numbers = #tpu.dot_dimension_numbers<[1], [0], [0], [1], [0, 0, 1, 1], [], []>} : vector<64x128xbf16>, vector<128x128xbf16>, vector<64x128xf32> -> vector<64x128xf32>
    %22 = arith.addf %17, %21 : vector<64x128xf32>
    %c32 = arith.constant 32 : index
    %c0_20 = arith.constant 0 : index
    %23 = vector.load %arg11[%c32, %c0_20] : memref<96x128xbf16, #tpu.memory_space<vmem>>, vector<64x128xbf16>
    %c2 = arith.constant 2 : index
    %c0_21 = arith.constant 0 : index
    %c0_22 = arith.constant 0 : index
    %24 = vector.load %arg4[%c2, %c0_21, %c0_22] : memref<3x128x128xbf16, #tpu.memory_space<vmem>>, vector<1x128x128xbf16>
    %25 = vector.shape_cast %24 : vector<1x128x128xbf16> to vector<128x128xbf16>
    %cst_23 = arith.constant dense<0.000000e+00> : vector<64x128xf32>
    %26 = tpu.matmul %23, %25, %cst_23 {dimension_numbers = #tpu.dot_dimension_numbers<[1], [0], [0], [1], [0, 0, 1, 1], [], []>} : vector<64x128xbf16>, vector<128x128xbf16>, vector<64x128xf32> -> vector<64x128xf32>
    %27 = arith.addf %22, %26 : vector<64x128xf32>
    %c0_24 = arith.constant 0 : index
    %c0_25 = arith.constant 0 : index
    %28 = vector.load %arg5[%c0_24, %c0_25] : memref<1x128xf32, #tpu.memory_space<vmem>>, vector<1x128xf32>
    %29 = vector.broadcast %28 : vector<1x128xf32> to vector<64x128xf32>
    %30 = arith.addf %27, %29 : vector<64x128xf32>
    %cst_26 = arith.constant 0.000000e+00 : f32
    %31 = vector.broadcast %cst_26 : f32 to vector<64x128xf32>
    %32 = arith.maximumf %30, %31 : vector<64x128xf32>
    %33 = arith.truncf %32 : vector<64x128xf32> to vector<64x128xbf16>
    %34 = vector.extract_strided_slice %33 {offsets = [0, 0], sizes = [16, 128], strides = [1, 1]} : vector<64x128xbf16> to vector<16x128xbf16>
    %c0_27 = arith.constant 0 : index
    %c0_28 = arith.constant 0 : index
    %c0_29 = arith.constant 0 : index
    %35 = vector.load %arg6[%c0_27, %c0_28, %c0_29] : memref<4x128x128xbf16, #tpu.memory_space<vmem>>, vector<1x128x128xbf16>
    %36 = vector.shape_cast %35 : vector<1x128x128xbf16> to vector<128x128xbf16>
    %cst_30 = arith.constant dense<0.000000e+00> : vector<16x128xf32>
    %37 = tpu.matmul %34, %36, %cst_30 {dimension_numbers = #tpu.dot_dimension_numbers<[1], [0], [0], [1], [0, 0, 1, 1], [], []>} : vector<16x128xbf16>, vector<128x128xbf16>, vector<16x128xf32> -> vector<16x128xf32>
    %38 = vector.extract_strided_slice %33 {offsets = [16, 0], sizes = [16, 128], strides = [1, 1]} : vector<64x128xbf16> to vector<16x128xbf16>
    %c1_31 = arith.constant 1 : index
    %c0_32 = arith.constant 0 : index
    %c0_33 = arith.constant 0 : index
    %39 = vector.load %arg6[%c1_31, %c0_32, %c0_33] : memref<4x128x128xbf16, #tpu.memory_space<vmem>>, vector<1x128x128xbf16>
    %40 = vector.shape_cast %39 : vector<1x128x128xbf16> to vector<128x128xbf16>
    %cst_34 = arith.constant dense<0.000000e+00> : vector<16x128xf32>
    %41 = tpu.matmul %38, %40, %cst_34 {dimension_numbers = #tpu.dot_dimension_numbers<[1], [0], [0], [1], [0, 0, 1, 1], [], []>} : vector<16x128xbf16>, vector<128x128xbf16>, vector<16x128xf32> -> vector<16x128xf32>
    %42 = arith.addf %37, %41 : vector<16x128xf32>
    %43 = vector.extract_strided_slice %33 {offsets = [32, 0], sizes = [16, 128], strides = [1, 1]} : vector<64x128xbf16> to vector<16x128xbf16>
    %c2_35 = arith.constant 2 : index
    %c0_36 = arith.constant 0 : index
    %c0_37 = arith.constant 0 : index
    %44 = vector.load %arg6[%c2_35, %c0_36, %c0_37] : memref<4x128x128xbf16, #tpu.memory_space<vmem>>, vector<1x128x128xbf16>
    %45 = vector.shape_cast %44 : vector<1x128x128xbf16> to vector<128x128xbf16>
    %cst_38 = arith.constant dense<0.000000e+00> : vector<16x128xf32>
    %46 = tpu.matmul %43, %45, %cst_38 {dimension_numbers = #tpu.dot_dimension_numbers<[1], [0], [0], [1], [0, 0, 1, 1], [], []>} : vector<16x128xbf16>, vector<128x128xbf16>, vector<16x128xf32> -> vector<16x128xf32>
    %47 = arith.addf %42, %46 : vector<16x128xf32>
    %48 = vector.extract_strided_slice %33 {offsets = [48, 0], sizes = [16, 128], strides = [1, 1]} : vector<64x128xbf16> to vector<16x128xbf16>
    %c3 = arith.constant 3 : index
    %c0_39 = arith.constant 0 : index
    %c0_40 = arith.constant 0 : index
    %49 = vector.load %arg6[%c3, %c0_39, %c0_40] : memref<4x128x128xbf16, #tpu.memory_space<vmem>>, vector<1x128x128xbf16>
    %50 = vector.shape_cast %49 : vector<1x128x128xbf16> to vector<128x128xbf16>
    %cst_41 = arith.constant dense<0.000000e+00> : vector<16x128xf32>
    %51 = tpu.matmul %48, %50, %cst_41 {dimension_numbers = #tpu.dot_dimension_numbers<[1], [0], [0], [1], [0, 0, 1, 1], [], []>} : vector<16x128xbf16>, vector<128x128xbf16>, vector<16x128xf32> -> vector<16x128xf32>
    %52 = arith.addf %47, %51 : vector<16x128xf32>
    %c0_42 = arith.constant 0 : index
    %c0_43 = arith.constant 0 : index
    %53 = vector.load %arg7[%c0_42, %c0_43] : memref<1x128xf32, #tpu.memory_space<vmem>>, vector<1x128xf32>
    %54 = vector.broadcast %53 : vector<1x128xf32> to vector<16x128xf32>
    %55 = arith.addf %52, %54 : vector<16x128xf32>
    %cst_44 = arith.constant 0.000000e+00 : f32
    %56 = vector.broadcast %cst_44 : f32 to vector<16x128xf32>
    %57 = arith.maximumf %55, %56 : vector<16x128xf32>
    %58 = arith.truncf %57 : vector<16x128xf32> to vector<16x128xbf16>
    %c0_45 = arith.constant 0 : index
    %c0_46 = arith.constant 0 : index
    %59 = vector.load %arg8[%c0_45, %c0_46] : memref<128x128xbf16, #tpu.memory_space<vmem>>, vector<128x128xbf16>
    %cst_47 = arith.constant dense<0.000000e+00> : vector<16x128xf32>
    %60 = tpu.matmul %58, %59, %cst_47 {dimension_numbers = #tpu.dot_dimension_numbers<[1], [0], [0], [1], [0, 0, 1, 1], [], []>} : vector<16x128xbf16>, vector<128x128xbf16>, vector<16x128xf32> -> vector<16x128xf32>
    %c0_48 = arith.constant 0 : index
    %c0_49 = arith.constant 0 : index
    %61 = vector.load %arg9[%c0_48, %c0_49] : memref<1x128xf32, #tpu.memory_space<vmem>>, vector<1x128xf32>
    %62 = vector.broadcast %61 : vector<1x128xf32> to vector<16x128xf32>
    %63 = arith.addf %60, %62 : vector<16x128xf32>
    %64 = math.tanh %63 : vector<16x128xf32>
    %c0_50 = arith.constant 0 : index
    %c0_51 = arith.constant 0 : index
    %65 = vector.load %arg10[%c0_50, %c0_51] : memref<16x128xf32, #tpu.memory_space<vmem>>, vector<16x128xf32>
    tpu.vector_store %arg10[%c0_50, %c0_51], %64 {strides = array<i32>} : memref<16x128xf32, #tpu.memory_space<vmem>>, vector<16x128xf32>,
    return
  }
  func.func @transform_0(%arg0: i32) -> (i32, i32, i32) {
    %c0_i32 = arith.constant 0 : i32
    %c0_i32_0 = arith.constant 0 : i32
    %c0_i32_1 = arith.constant 0 : i32
    return %arg0, %c0_i32, %c0_i32_0 : i32, i32, i32
  }
  func.func @transform_1(%arg0: i32) -> (i32, i32) {
    %c0_i32 = arith.constant 0 : i32
    %c0_i32_0 = arith.constant 0 : i32
    %c0_i32_1 = arith.constant 0 : i32
    return %c0_i32, %c0_i32_0 : i32, i32
  }
  func.func @transform_2(%arg0: i32) -> (i32, i32) {
    %c0_i32 = arith.constant 0 : i32
    %c0_i32_0 = arith.constant 0 : i32
    %c0_i32_1 = arith.constant 0 : i32
    return %c0_i32, %c0_i32_0 : i32, i32
  }
  func.func @transform_3(%arg0: i32) -> (i32, i32, i32) {
    %c0_i32 = arith.constant 0 : i32
    %c0_i32_0 = arith.constant 0 : i32
    %c0_i32_1 = arith.constant 0 : i32
    %c0_i32_2 = arith.constant 0 : i32
    return %c0_i32, %c0_i32_0, %c0_i32_1 : i32, i32, i32
  }
  func.func @transform_4(%arg0: i32) -> (i32, i32) {
    %c0_i32 = arith.constant 0 : i32
    %c0_i32_0 = arith.constant 0 : i32
    %c0_i32_1 = arith.constant 0 : i32
    return %c0_i32, %c0_i32_0 : i32, i32
  }
  func.func @transform_5(%arg0: i32) -> (i32, i32, i32) {
    %c0_i32 = arith.constant 0 : i32
    %c0_i32_0 = arith.constant 0 : i32
    %c0_i32_1 = arith.constant 0 : i32
    %c0_i32_2 = arith.constant 0 : i32
    return %c0_i32, %c0_i32_0, %c0_i32_1 : i32, i32, i32
  }
  func.func @transform_6(%arg0: i32) -> (i32, i32) {
    %c0_i32 = arith.constant 0 : i32
    %c0_i32_0 = arith.constant 0 : i32
    %c0_i32_1 = arith.constant 0 : i32
    return %c0_i32, %c0_i32_0 : i32, i32
  }
  func.func @transform_7(%arg0: i32) -> (i32, i32) {
    %c0_i32 = arith.constant 0 : i32
    %c0_i32_0 = arith.constant 0 : i32
    %c0_i32_1 = arith.constant 0 : i32
    return %c0_i32, %c0_i32_0 : i32, i32
  }
  func.func @transform_8(%arg0: i32) -> (i32, i32) {
    %c0_i32 = arith.constant 0 : i32
    %c0_i32_0 = arith.constant 0 : i32
    %c0_i32_1 = arith.constant 0 : i32
    return %c0_i32, %c0_i32_0 : i32, i32
  }
  func.func @transform_9(%arg0: i32) -> (i32, i32) {
    %c0_i32 = arith.constant 0 : i32
    %c0_i32_0 = arith.constant 0 : i32
    return %arg0, %c0_i32 : i32, i32
  }
}

</mosaic_0001>

<llo_original>
// kernel: encoder_aeris_forward.1
$region0: #{encoder_aeris_forward.1}
  #allocation0 [shape = 'u32[]', space=smem, size = 0x4, offset = 0x4, fixed_abs, tag = 'smem constant byte address 0x4 - core index']
  #allocation1 [shape = 'u32[144,128]{1,0:T(1,128)}', space=vmem, size = 0x12000, scoped, tag = 'internal scratch']
  #allocation2 [shape = 'bf16[96,128]{1,0:T(16,128)(2,1)}', space=vmem, size = 0x6000, scoped, tag = 'scratch operand']
  %s0 = inlined_call_operand.vmem [shape: bf16[1,64,128], index: 0, kind: input, shape index: {}]
  %s1 = inlined_call_operand.vmem [shape: bf16[128,128], index: 1, kind: input, shape index: {}]
  %s2 = inlined_call_operand.vmem [shape: f32[1,128], index: 2, kind: input, shape index: {}]
  %s3 = inlined_call_operand.vmem [shape: bf16[3,128,128], index: 3, kind: input, shape index: {}]
  %s4 = inlined_call_operand.vmem [shape: f32[1,128], index: 4, kind: input, shape index: {}]
  %s5 = inlined_call_operand.vmem [shape: bf16[4,128,128], index: 5, kind: input, shape index: {}]
  %s6 = inlined_call_operand.vmem [shape: f32[1,128], index: 6, kind: input, shape index: {}]
  %s7 = inlined_call_operand.vmem [shape: bf16[128,128], index: 7, kind: input, shape index: {}]
  %s8 = inlined_call_operand.vmem [shape: f32[1,128], index: 8, kind: input, shape index: {}]
  %s9 = inlined_call_operand.vmem [shape: f32[16,128], index: 9, kind: output, shape index: {}]
  %s10 = sld [smem:[#allocation0]]
  $region50: #{encoder_aeris_forward.1} parent=0
    _
  %s12 = ssub.s32 1, %s10
  %s13 = scalar_select 0, %s12, %s10
  // Predicated region
  $region2: #{encoder_aeris_forward.1} parent=0 // pred_check
    _
  $region3: #{encoder_aeris_forward.1} parent=0 // pred_check_branch
    %15 = sbr.rel (0) target = $region5
  $region4: #{encoder_aeris_forward.1} parent=0 // pred_region
    _
  $region5: #{encoder_aeris_forward.1} parent=0 // pred_fallthru
    _
  // Predicated region
  $region6: #{encoder_aeris_forward.1} parent=0 // pred_check
    _
  $region7: #{encoder_aeris_forward.1} parent=0 // pred_check_branch
    %17 = sbr.rel (0) target = $region9
  $region8: #{encoder_aeris_forward.1} parent=0 // pred_region
    _
  $region9: #{encoder_aeris_forward.1} parent=0 // pred_fallthru
    _
  // Predicated region
  $region10: #{encoder_aeris_forward.1} parent=0 // pred_check
    _
  $region11: #{encoder_aeris_forward.1} parent=0 // pred_check_branch
    %19 = sbr.rel (0) target = $region13
  $region12: #{encoder_aeris_forward.1} parent=0 // pred_region
    _
  $region13: #{encoder_aeris_forward.1} parent=0 // pred_fallthru
    _
  // Predicated region
  $region14: #{encoder_aeris_forward.1} parent=0 // pred_check
    _
  $region15: #{encoder_aeris_forward.1} parent=0 // pred_check_branch
    %21 = sbr.rel (0) target = $region17
  $region16: #{encoder_aeris_forward.1} parent=0 // pred_region
    _
  $region17: #{encoder_aeris_forward.1} parent=0 // pred_fallthru
    _
  // Predicated region
  $region18: #{encoder_aeris_forward.1} parent=0 // pred_check
    _
  $region19: #{encoder_aeris_forward.1} parent=0 // pred_check_branch
    %23 = sbr.rel (0) target = $region21
  $region20: #{encoder_aeris_forward.1} parent=0 // pred_region
    _
  $region21: #{encoder_aeris_forward.1} parent=0 // pred_fallthru
    _
  // Predicated region
  $region22: #{encoder_aeris_forward.1} parent=0 // pred_check
    _
  $region23: #{encoder_aeris_forward.1} parent=0 // pred_check_branch
    %25 = sbr.rel (0) target = $region25
  $region24: #{encoder_aeris_forward.1} parent=0 // pred_region
    _
  $region25: #{encoder_aeris_forward.1} parent=0 // pred_fallthru
    _
  // Predicated region
  $region26: #{encoder_aeris_forward.1} parent=0 // pred_check
    _
  $region27: #{encoder_aeris_forward.1} parent=0 // pred_check_branch
    %27 = sbr.rel (0) target = $region29
  $region28: #{encoder_aeris_forward.1} parent=0 // pred_region
    _
  $region29: #{encoder_aeris_forward.1} parent=0 // pred_fallthru
    _
  // Predicated region
  $region30: #{encoder_aeris_forward.1} parent=0 // pred_check
    _
  $region31: #{encoder_aeris_forward.1} parent=0 // pred_check_branch
    %29 = sbr.rel (0) target = $region33
  $region32: #{encoder_aeris_forward.1} parent=0 // pred_region
    _
  $region33: #{encoder_aeris_forward.1} parent=0 // pred_fallthru
    _
  // Predicated region
  $region34: #{encoder_aeris_forward.1} parent=0 // pred_check
    _
  $region35: #{encoder_aeris_forward.1} parent=0 // pred_check_branch
    %31 = sbr.rel (0) target = $region37
  $region36: #{encoder_aeris_forward.1} parent=0 // pred_region
    _
  $region37: #{encoder_aeris_forward.1} parent=0 // pred_fallthru
    _
  %v33 = vld [vmem:[%s0] sm:$0xf]
  %v34 = vld [vmem:[%s0 + $0x4] sm:$0xf]
  %v35 = vld [vmem:[%s0 + $0x8] sm:$0xf]
  %v36 = vld [vmem:[%s0 + $0xc] sm:$0xf]
  %v37 = vld [vmem:[%s0 + $0x10] sm:$0xf]
  %v38 = vld [vmem:[%s0 + $0x14] sm:$0xf]
  %v39 = vld [vmem:[%s0 + $0x18] sm:$0xf]
  %v40 = vld [vmem:[%s0 + $0x1c] sm:$0xf]
  %v41 = vld [vmem:[%s1] sm:$0xf]
  %v42 = vld [vmem:[%s1 + $0x4] sm:$0xf]
  %v43 = vld [vmem:[%s1 + $0x8] sm:$0xf]
  %v44 = vld [vmem:[%s1 + $0xc] sm:$0xf]
  %v45 = vld [vmem:[%s1 + $0x10] sm:$0xf]
  %v46 = vld [vmem:[%s1 + $0x14] sm:$0xf]
  %v47 = vld [vmem:[%s1 + $0x18] sm:$0xf]
  %v48 = vld [vmem:[%s1 + $0x1c] sm:$0xf]
  %v49 = vld [vmem:[%s1 + $0x20] sm:$0xf]
  %v50 = vld [vmem:[%s1 + $0x24] sm:$0xf]
  %v51 = vld [vmem:[%s1 + $0x28] sm:$0xf]
  %v52 = vld [vmem:[%s1 + $0x2c] sm:$0xf]
  %v53 = vld [vmem:[%s1 + $0x30] sm:$0xf]
  %v54 = vld [vmem:[%s1 + $0x34] sm:$0xf]
  %v55 = vld [vmem:[%s1 + $0x38] sm:$0xf]
  %v56 = vld [vmem:[%s1 + $0x3c] sm:$0xf]
  %v57 = vld [vmem:[%s2] sm:$0x1]
  %v59 = vlaneseq
  %v60 = vshrl.u32 %v59, 7
  %v61 = vsub.s32 0, %v60
  %v62 = vrot.slane %v57, %v61
  %v72 = vunpack.c.l.b16 %v33
  %v73 = vunpack.c.l.b16 %v34
  %v74 = vunpack.c.l.b16 %v35
  %v75 = vunpack.c.l.b16 %v36
  %v76 = vunpack.c.l.b16 %v37
  %v77 = vunpack.c.l.b16 %v38
  %v78 = vunpack.c.l.b16 %v39
  %v79 = vunpack.c.l.b16 %v40
  %v80 = vpack.c.b16 %v73, %v72
  %v81 = vpack.c.b16 %v75, %v74
  %v82 = vpack.c.b16 %v77, %v76
  %v83 = vpack.c.b16 %v79, %v78
  %v104 = vunpack.c.l.b16 %v41
  %v105 = vunpack.c.l.b16 %v42
  %v106 = vunpack.c.l.b16 %v43
  %v107 = vunpack.c.l.b16 %v44
  %v108 = vunpack.c.l.b16 %v45
  %v109 = vunpack.c.l.b16 %v46
  %v110 = vunpack.c.l.b16 %v47
  %v111 = vunpack.c.l.b16 %v48
  %v112 = vunpack.c.l.b16 %v49
  %v113 = vunpack.c.l.b16 %v50
  %v114 = vunpack.c.l.b16 %v51
  %v115 = vunpack.c.l.b16 %v52
  %v116 = vunpack.c.l.b16 %v53
  %v117 = vunpack.c.l.b16 %v54
  %v118 = vunpack.c.l.b16 %v55
  %v119 = vunpack.c.l.b16 %v56
  %v120 = vpack.c.b16 %v105, %v104
  %v121 = vpack.c.b16 %v107, %v106
  %v122 = vpack.c.b16 %v109, %v108
  %v123 = vpack.c.b16 %v111, %v110
  %v124 = vpack.c.b16 %v113, %v112
  %v125 = vpack.c.b16 %v115, %v114
  %v126 = vpack.c.b16 %v117, %v116
  %v127 = vpack.c.b16 %v119, %v118
  %136 = vmatprep.subr.bf16.mxu0 0
  %137 = vmatpush1.bf16.msra.mxu0 %v120
  %138 = vmatprep.subr.bf16.mxu0 0
  %139 = vmatpush1.bf16.msra.mxu0 %v121
  %140 = vmatprep.subr.bf16.mxu0 0
  %141 = vmatpush1.bf16.msra.mxu0 %v122
  %142 = vmatprep.subr.bf16.mxu0 0
  %143 = vmatpush1.bf16.msra.mxu0 %v123
  %144 = vmatprep.subr.bf16.mxu0 0
  %145 = vmatpush1.bf16.msra.mxu0 %v124
  %146 = vmatprep.subr.bf16.mxu0 0
  %147 = vmatpush1.bf16.msra.mxu0 %v125
  %148 = vmatprep.subr.bf16.mxu0 0
  %149 = vmatpush1.bf16.msra.mxu0 %v126
  %150 = vmatprep.subr.bf16.mxu0 0
  %151 = vmatpush1.bf16.msra.mxu0 %v127
  %152 = vmatprep.subr.bf16.mxu0 0
  %153 = vmatpush1.bf16.msra.mxu0 0
  %154 = vmatprep.subr.bf16.mxu0 0
  %155 = vmatpush1.bf16.msra.mxu0 0
  %156 = vmatprep.subr.bf16.mxu0 0
  %157 = vmatpush1.bf16.msra.mxu0 0
  %158 = vmatprep.subr.bf16.mxu0 0
  %159 = vmatpush1.bf16.msra.mxu0 0
  %160 = vmatprep.subr.bf16.mxu0 0
  %161 = vmatpush1.bf16.msra.mxu0 0
  %162 = vmatprep.subr.bf16.mxu0 0
  %163 = vmatpush1.bf16.msra.mxu0 0
  %164 = vmatprep.subr.bf16.mxu0 0
  %165 = vmatpush1.bf16.msra.mxu0 0
  %166 = vmatprep.subr.bf16.mxu0 0
  %167 = vmatpush1.bf16.msra.mxu0 0
  %168 = vmatprep.mubr.bf16.mxu0 0
  %169 = vmatmul.mubr.bf16.gmra.mrb[0].mxu0 %v80
  %v170 = vpop.f32.mrb[0].mxu0
  %v171 = vadd.f32 %v62, %v170
  %v172 = vpop.f32.mrb[0].mxu0
  %v173 = vpop.f32.mrb[0].mxu0
  %v174 = vadd.f32 %v62, %v173
  %v175 = vpop.f32.mrb[0].mxu0
  %176 = vmatprep.mubr.bf16.mxu0 0
  %177 = vmatmul.mubr.bf16.gmra.mrb[0].mxu0 %v81
  %v178 = vpop.f32.mrb[0].mxu0
  %v179 = vadd.f32 %v62, %v178
  %v180 = vpop.f32.mrb[0].mxu0
  %v181 = vpop.f32.mrb[0].mxu0
  %v182 = vadd.f32 %v62, %v181
  %v183 = vpop.f32.mrb[0].mxu0
  %184 = vmatprep.mubr.bf16.mxu0 0
  %185 = vmatmul.mubr.bf16.gmra.mrb[0].mxu0 %v82
  %v186 = vpop.f32.mrb[0].mxu0
  %v187 = vadd.f32 %v62, %v186
  %v188 = vpop.f32.mrb[0].mxu0
  %v189 = vpop.f32.mrb[0].mxu0
  %v190 = vadd.f32 %v62, %v189
  %v191 = vpop.f32.mrb[0].mxu0
  %192 = vmatprep.mubr.bf16.mxu0 0
  %193 = vmatmul.mubr.bf16.gmra.mrb[0].mxu0 %v83
  %v194 = vpop.f32.mrb[0].mxu0
  %v195 = vadd.f32 %v62, %v194
  %v196 = vpop.f32.mrb[0].mxu0
  %v197 = vpop.f32.mrb[0].mxu0
  %v198 = vadd.f32 %v62, %v197
  %v199 = vpop.f32.mrb[0].mxu0
  %200 = vdwg.mxu0
  %v201 = vmax.f32 %v171, 0.0
  %v202 = vmax.f32 %v174, 0.0
  %v203 = vmax.f32 %v179, 0.0
  %v204 = vmax.f32 %v182, 0.0
  %v205 = vmax.f32 %v187, 0.0
  %v206 = vmax.f32 %v190, 0.0
  %v207 = vmax.f32 %v195, 0.0
  %v208 = vmax.f32 %v198, 0.0
  %p209 = scmp.eq.s32.totalorder 0, 0
  // Predicated region
  $region38: #{encoder_aeris_forward.1} parent=0 // pred_check
    %p210 = pneg %p209
  $region39: #{encoder_aeris_forward.1} parent=0 // pred_check_branch
    %212 = sbr.rel (%p210) target = $region41
  $region40: #{encoder_aeris_forward.1} parent=0 // pred_region
    %213 = vst [vmem:[#allocation2] sm:$0xff] 0
    %214 = vst [vmem:[#allocation2 + $0x28] sm:$0xff] 0
  $region41: #{encoder_aeris_forward.1} parent=0 // pred_fallthru
    _
  %v215 = vpack.c.bf16 %v202, %v201
  %v216 = vpack.c.bf16 %v204, %v203
  %v217 = vpack.c.bf16 %v206, %v205
  %v218 = vpack.c.bf16 %v208, %v207
  %219 = vst [vmem:[#allocation2 + $0x8] sm:$0xff] %v215
  %220 = vst [vmem:[#allocation2 + $0x10] sm:$0xff] %v216
  %221 = vst [vmem:[#allocation2 + $0x18] sm:$0xff] %v217
  %222 = vst [vmem:[#allocation2 + $0x20] sm:$0xff] %v218
  %v223 = vld [vmem:[#allocation2] sm:$0xff]
  %v224 = vld [vmem:[#allocation2 + $0x8] sm:$0xff]
  %v225 = vld [vmem:[#allocation2 + $0x10] sm:$0xff]
  %v226 = vld [vmem:[#allocation2 + $0x18] sm:$0xff]
  %v227 = vld [vmem:[%s3] sm:$0xf]
  %v228 = vld [vmem:[%s3 + $0x4] sm:$0xf]
  %v229 = vld [vmem:[%s3 + $0x8] sm:$0xf]
  %v230 = vld [vmem:[%s3 + $0xc] sm:$0xf]
  %v231 = vld [vmem:[%s3 + $0x10] sm:$0xf]
  %v232 = vld [vmem:[%s3 + $0x14] sm:$0xf]
  %v233 = vld [vmem:[%s3 + $0x18] sm:$0xf]
  %v234 = vld [vmem:[%s3 + $0x1c] sm:$0xf]
  %v235 = vld [vmem:[%s3 + $0x20] sm:$0xf]
  %v236 = vld [vmem:[%s3 + $0x24] sm:$0xf]
  %v237 = vld [vmem:[%s3 + $0x28] sm:$0xf]
  %v238 = vld [vmem:[%s3 + $0x2c] sm:$0xf]
  %v239 = vld [vmem:[%s3 + $0x30] sm:$0xf]
  %v240 = vld [vmem:[%s3 + $0x34] sm:$0xf]
  %v241 = vld [vmem:[%s3 + $0x38] sm:$0xf]
  %v242 = vld [vmem:[%s3 + $0x3c] sm:$0xf]
  %v243 = vld [vmem:[#allocation2 + $0x20] sm:$0xff]
  %s244 = scalar_lea.vmem %s3, 64
  %v245 = vld [vmem:[%s244] sm:$0xf]
  %v246 = vld [vmem:[%s244 + $0x4] sm:$0xf]
  %v247 = vld [vmem:[%s244 + $0x8] sm:$0xf]
  %v248 = vld [vmem:[%s244 + $0xc] sm:$0xf]
  %v249 = vld [vmem:[%s244 + $0x10] sm:$0xf]
  %v250 = vld [vmem:[%s244 + $0x14] sm:$0xf]
  %v251 = vld [vmem:[%s244 + $0x18] sm:$0xf]
  %v252 = vld [vmem:[%s244 + $0x1c] sm:$0xf]
  %v253 = vld [vmem:[%s244 + $0x20] sm:$0xf]
  %v254 = vld [vmem:[%s244 + $0x24] sm:$0xf]
  %v255 = vld [vmem:[%s244 + $0x28] sm:$0xf]
  %v256 = vld [vmem:[%s244 + $0x2c] sm:$0xf]
  %v257 = vld [vmem:[%s244 + $0x30] sm:$0xf]
  %v258 = vld [vmem:[%s244 + $0x34] sm:$0xf]
  %v259 = vld [vmem:[%s244 + $0x38] sm:$0xf]
  %v260 = vld [vmem:[%s244 + $0x3c] sm:$0xf]
  %v277 = vunpack.c.l.b16 %v245
  %v278 = vunpack.c.l.b16 %v246
  %v279 = vunpack.c.l.b16 %v247
  %v280 = vunpack.c.l.b16 %v248
  %v281 = vunpack.c.l.b16 %v249
  %v282 = vunpack.c.l.b16 %v250
  %v283 = vunpack.c.l.b16 %v251
  %v284 = vunpack.c.l.b16 %v252
  %v285 = vunpack.c.l.b16 %v253
  %v286 = vunpack.c.l.b16 %v254
  %v287 = vunpack.c.l.b16 %v255
  %v288 = vunpack.c.l.b16 %v256
  %v289 = vunpack.c.l.b16 %v257
  %v290 = vunpack.c.l.b16 %v258
  %v291 = vunpack.c.l.b16 %v259
  %v292 = vunpack.c.l.b16 %v260
  %v293 = vpack.c.b16 %v278, %v277
  %v294 = vpack.c.b16 %v280, %v279
  %v295 = vpack.c.b16 %v282, %v281
  %v296 = vpack.c.b16 %v284, %v283
  %v297 = vpack.c.b16 %v286, %v285
  %v298 = vpack.c.b16 %v288, %v287
  %v299 = vpack.c.b16 %v290, %v289
  %v300 = vpack.c.b16 %v292, %v291
  %309 = vmatprep.subr.bf16.mxu0 0
  %310 = vmatpush1.bf16.msra.mxu0 %v293
  %311 = vmatprep.subr.bf16.mxu0 0
  %312 = vmatpush1.bf16.msra.mxu0 %v294
  %313 = vmatprep.subr.bf16.mxu0 0
  %314 = vmatpush1.bf16.msra.mxu0 %v295
  %315 = vmatprep.subr.bf16.mxu0 0
  %316 = vmatpush1.bf16.msra.mxu0 %v296
  %317 = vmatprep.subr.bf16.mxu0 0
  %318 = vmatpush1.bf16.msra.mxu0 %v297
  %319 = vmatprep.subr.bf16.mxu0 0
  %320 = vmatpush1.bf16.msra.mxu0 %v298
  %321 = vmatprep.subr.bf16.mxu0 0
  %322 = vmatpush1.bf16.msra.mxu0 %v299
  %323 = vmatprep.subr.bf16.mxu0 0
  %324 = vmatpush1.bf16.msra.mxu0 %v300
  %325 = vmatprep.subr.bf16.mxu0 0
  %326 = vmatpush1.bf16.msra.mxu0 0
  %327 = vmatprep.subr.bf16.mxu0 0
  %328 = vmatpush1.bf16.msra.mxu0 0
  %329 = vmatprep.subr.bf16.mxu0 0
  %330 = vmatpush1.bf16.msra.mxu0 0
  %331 = vmatprep.subr.bf16.mxu0 0
  %332 = vmatpush1.bf16.msra.mxu0 0
  %333 = vmatprep.subr.bf16.mxu0 0
  %334 = vmatpush1.bf16.msra.mxu0 0
  %335 = vmatprep.subr.bf16.mxu0 0
  %336 = vmatpush1.bf16.msra.mxu0 0
  %337 = vmatprep.subr.bf16.mxu0 0
  %338 = vmatpush1.bf16.msra.mxu0 0
  %339 = vmatprep.subr.bf16.mxu0 0
  %340 = vmatpush1.bf16.msra.mxu0 0
  %341 = vmatprep.mubr.bf16.mxu0 0
  %342 = vmatmul.mubr.bf16.gmra.mrb[0].mxu0 %v224
  %v343 = vpop.f32.mrb[0].mxu0
  %v344 = vadd.f32 0.0, %v343
  %v345 = vpop.f32.mrb[0].mxu0
  %v346 = vpop.f32.mrb[0].mxu0
  %v347 = vadd.f32 0.0, %v346
  %v348 = vpop.f32.mrb[0].mxu0
  %349 = vmatprep.mubr.bf16.mxu0 0
  %350 = vmatmul.mubr.bf16.gmra.mrb[0].mxu0 %v225
  %v351 = vpop.f32.mrb[0].mxu0
  %v352 = vadd.f32 0.0, %v351
  %v353 = vpop.f32.mrb[0].mxu0
  %v354 = vpop.f32.mrb[0].mxu0
  %v355 = vadd.f32 0.0, %v354
  %v356 = vpop.f32.mrb[0].mxu0
  %357 = vmatprep.mubr.bf16.mxu0 0
  %358 = vmatmul.mubr.bf16.gmra.mrb[0].mxu0 %v226
  %v359 = vpop.f32.mrb[0].mxu0
  %v360 = vadd.f32 0.0, %v359
  %v361 = vpop.f32.mrb[0].mxu0
  %v362 = vpop.f32.mrb[0].mxu0
  %v363 = vadd.f32 0.0, %v362
  %v364 = vpop.f32.mrb[0].mxu0
  %365 = vmatprep.mubr.bf16.mxu0 0
  %366 = vmatmul.mubr.bf16.gmra.mrb[0].mxu0 %v243
  %v367 = vpop.f32.mrb[0].mxu0
  %v368 = vadd.f32 0.0, %v367
  %v369 = vpop.f32.mrb[0].mxu0
  %v370 = vpop.f32.mrb[0].mxu0
  %v371 = vadd.f32 0.0, %v370
  %v372 = vpop.f32.mrb[0].mxu0
  %373 = vdwg.mxu0
  %v390 = vunpack.c.l.b16 %v227
  %v391 = vunpack.c.l.b16 %v228
  %v392 = vunpack.c.l.b16 %v229
  %v393 = vunpack.c.l.b16 %v230
  %v394 = vunpack.c.l.b16 %v231
  %v395 = vunpack.c.l.b16 %v232
  %v396 = vunpack.c.l.b16 %v233
  %v397 = vunpack.c.l.b16 %v234
  %v398 = vunpack.c.l.b16 %v235
  %v399 = vunpack.c.l.b16 %v236
  %v400 = vunpack.c.l.b16 %v237
  %v401 = vunpack.c.l.b16 %v238
  %v402 = vunpack.c.l.b16 %v239
  %v403 = vunpack.c.l.b16 %v240
  %v404 = vunpack.c.l.b16 %v241
  %v405 = vunpack.c.l.b16 %v242
  %v406 = vpack.c.b16 %v391, %v390
  %v407 = vpack.c.b16 %v393, %v392
  %v408 = vpack.c.b16 %v395, %v394
  %v409 = vpack.c.b16 %v397, %v396
  %v410 = vpack.c.b16 %v399, %v398
  %v411 = vpack.c.b16 %v401, %v400
  %v412 = vpack.c.b16 %v403, %v402
  %v413 = vpack.c.b16 %v405, %v404
  %422 = vmatprep.subr.bf16.mxu0 0
  %423 = vmatpush1.bf16.msra.mxu0 %v406
  %424 = vmatprep.subr.bf16.mxu0 0
  %425 = vmatpush1.bf16.msra.mxu0 %v407
  %426 = vmatprep.subr.bf16.mxu0 0
  %427 = vmatpush1.bf16.msra.mxu0 %v408
  %428 = vmatprep.subr.bf16.mxu0 0
  %429 = vmatpush1.bf16.msra.mxu0 %v409
  %430 = vmatprep.subr.bf16.mxu0 0
  %431 = vmatpush1.bf16.msra.mxu0 %v410
  %432 = vmatprep.subr.bf16.mxu0 0
  %433 = vmatpush1.bf16.msra.mxu0 %v411
  %434 = vmatprep.subr.bf16.mxu0 0
  %435 = vmatpush1.bf16.msra.mxu0 %v412
  %436 = vmatprep.subr.bf16.mxu0 0
  %437 = vmatpush1.bf16.msra.mxu0 %v413
  %438 = vmatprep.subr.bf16.mxu0 0
  %439 = vmatpush1.bf16.msra.mxu0 0
  %440 = vmatprep.subr.bf16.mxu0 0
  %441 = vmatpush1.bf16.msra.mxu0 0
  %442 = vmatprep.subr.bf16.mxu0 0
  %443 = vmatpush1.bf16.msra.mxu0 0
  %444 = vmatprep.subr.bf16.mxu0 0
  %445 = vmatpush1.bf16.msra.mxu0 0
  %446 = vmatprep.subr.bf16.mxu0 0
  %447 = vmatpush1.bf16.msra.mxu0 0
  %448 = vmatprep.subr.bf16.mxu0 0
  %449 = vmatpush1.bf16.msra.mxu0 0
  %450 = vmatprep.subr.bf16.mxu0 0
  %451 = vmatpush1.bf16.msra.mxu0 0
  %452 = vmatprep.subr.bf16.mxu0 0
  %453 = vmatpush1.bf16.msra.mxu0 0
  %454 = vmatprep.mubr.bf16.mxu0 0
  %455 = vmatmul.mubr.bf16.gmra.mrb[0].mxu0 %v223
  %v456 = vpop.f32.mrb[0].mxu0
  %v457 = vadd.f32 %v344, %v456
  %v458 = vpop.f32.mrb[0].mxu0
  %v459 = vpop.f32.mrb[0].mxu0
  %v460 = vadd.f32 %v347, %v459
  %v461 = vpop.f32.mrb[0].mxu0
  %462 = vmatprep.mubr.bf16.mxu0 0
  %463 = vmatmul.mubr.bf16.gmra.mrb[0].mxu0 %v224
  %v464 = vpop.f32.mrb[0].mxu0
  %v465 = vadd.f32 %v352, %v464
  %v466 = vpop.f32.mrb[0].mxu0
  %v467 = vpop.f32.mrb[0].mxu0
  %v468 = vadd.f32 %v355, %v467
  %v469 = vpop.f32.mrb[0].mxu0
  %470 = vmatprep.mubr.bf16.mxu0 0
  %471 = vmatmul.mubr.bf16.gmra.mrb[0].mxu0 %v225
  %v472 = vpop.f32.mrb[0].mxu0
  %v473 = vadd.f32 %v360, %v472
  %v474 = vpop.f32.mrb[0].mxu0
  %v475 = vpop.f32.mrb[0].mxu0
  %v476 = vadd.f32 %v363, %v475
  %v477 = vpop.f32.mrb[0].mxu0
  %478 = vmatprep.mubr.bf16.mxu0 0
  %479 = vmatmul.mubr.bf16.gmra.mrb[0].mxu0 %v226
  %v480 = vpop.f32.mrb[0].mxu0
  %v481 = vadd.f32 %v368, %v480
  %v482 = vpop.f32.mrb[0].mxu0
  %v483 = vpop.f32.mrb[0].mxu0
  %v484 = vadd.f32 %v371, %v483
  %v485 = vpop.f32.mrb[0].mxu0
  %486 = vdwg.mxu0
  %v487 = vld [vmem:[#allocation2 + $0x10] sm:$0xff]
  %v488 = vld [vmem:[#allocation2 + $0x18] sm:$0xff]
  %v489 = vld [vmem:[#allocation2 + $0x20] sm:$0xff]
  %v490 = vld [vmem:[#allocation2 + $0x28] sm:$0xff]
  %s491 = scalar_lea.vmem %s3, 128
  %v492 = vld [vmem:[%s491] sm:$0xf]
  %v493 = vld [vmem:[%s491 + $0x4] sm:$0xf]
  %v494 = vld [vmem:[%s491 + $0x8] sm:$0xf]
  %v495 = vld [vmem:[%s491 + $0xc] sm:$0xf]
  %v496 = vld [vmem:[%s491 + $0x10] sm:$0xf]
  %v497 = vld [vmem:[%s491 + $0x14] sm:$0xf]
  %v498 = vld [vmem:[%s491 + $0x18] sm:$0xf]
  %v499 = vld [vmem:[%s491 + $0x1c] sm:$0xf]
  %v500 = vld [vmem:[%s491 + $0x20] sm:$0xf]
  %v501 = vld [vmem:[%s491 + $0x24] sm:$0xf]
  %v502 = vld [vmem:[%s491 + $0x28] sm:$0xf]
  %v503 = vld [vmem:[%s491 + $0x2c] sm:$0xf]
  %v504 = vld [vmem:[%s491 + $0x30] sm:$0xf]
  %v505 = vld [vmem:[%s491 + $0x34] sm:$0xf]
  %v506 = vld [vmem:[%s491 + $0x38] sm:$0xf]
  %v507 = vld [vmem:[%s491 + $0x3c] sm:$0xf]
  %v524 = vunpack.c.l.b16 %v492
  %v525 = vunpack.c.l.b16 %v493
  %v526 = vunpack.c.l.b16 %v494
  %v527 = vunpack.c.l.b16 %v495
  %v528 = vunpack.c.l.b16 %v496
  %v529 = vunpack.c.l.b16 %v497
  %v530 = vunpack.c.l.b16 %v498
  %v531 = vunpack.c.l.b16 %v499
  %v532 = vunpack.c.l.b16 %v500
  %v533 = vunpack.c.l.b16 %v501
  %v534 = vunpack.c.l.b16 %v502
  %v535 = vunpack.c.l.b16 %v503
  %v536 = vunpack.c.l.b16 %v504
  %v537 = vunpack.c.l.b16 %v505
  %v538 = vunpack.c.l.b16 %v506
  %v539 = vunpack.c.l.b16 %v507
  %v540 = vpack.c.b16 %v525, %v524
  %v541 = vpack.c.b16 %v527, %v526
  %v542 = vpack.c.b16 %v529, %v528
  %v543 = vpack.c.b16 %v531, %v530
  %v544 = vpack.c.b16 %v533, %v532
  %v545 = vpack.c.b16 %v535, %v534
  %v546 = vpack.c.b16 %v537, %v536
  %v547 = vpack.c.b16 %v539, %v538
  %556 = vmatprep.subr.bf16.mxu0 0
  %557 = vmatpush1.bf16.msra.mxu0 %v540
  %558 = vmatprep.subr.bf16.mxu0 0
  %559 = vmatpush1.bf16.msra.mxu0 %v541
  %560 = vmatprep.subr.bf16.mxu0 0
  %561 = vmatpush1.bf16.msra.mxu0 %v542
  %562 = vmatprep.subr.bf16.mxu0 0
  %563 = vmatpush1.bf16.msra.mxu0 %v543
  %564 = vmatprep.subr.bf16.mxu0 0
  %565 = vmatpush1.bf16.msra.mxu0 %v544
  %566 = vmatprep.subr.bf16.mxu0 0
  %567 = vmatpush1.bf16.msra.mxu0 %v545
  %568 = vmatprep.subr.bf16.mxu0 0
  %569 = vmatpush1.bf16.msra.mxu0 %v546
  %570 = vmatprep.subr.bf16.mxu0 0
  %571 = vmatpush1.bf16.msra.mxu0 %v547
  %572 = vmatprep.subr.bf16.mxu0 0
  %573 = vmatpush1.bf16.msra.mxu0 0
  %574 = vmatprep.subr.bf16.mxu0 0
  %575 = vmatpush1.bf16.msra.mxu0 0
  %576 = vmatprep.subr.bf16.mxu0 0
  %577 = vmatpush1.bf16.msra.mxu0 0
  %578 = vmatprep.subr.bf16.mxu0 0
  %579 = vmatpush1.bf16.msra.mxu0 0
  %580 = vmatprep.subr.bf16.mxu0 0
  %581 = vmatpush1.bf16.msra.mxu0 0
  %582 = vmatprep.subr.bf16.mxu0 0
  %583 = vmatpush1.bf16.msra.mxu0 0
  %584 = vmatprep.subr.bf16.mxu0 0
  %585 = vmatpush1.bf16.msra.mxu0 0
  %586 = vmatprep.subr.bf16.mxu0 0
  %587 = vmatpush1.bf16.msra.mxu0 0
  %588 = vmatprep.mubr.bf16.mxu0 0
  %589 = vmatmul.mubr.bf16.gmra.mrb[0].mxu0 %v487
  %v590 = vpop.f32.mrb[0].mxu0
  %v591 = vadd.f32 0.0, %v590
  %v592 = vpop.f32.mrb[0].mxu0
  %v593 = vpop.f32.mrb[0].mxu0
  %v594 = vadd.f32 0.0, %v593
  %v595 = vpop.f32.mrb[0].mxu0
  %596 = vmatprep.mubr.bf16.mxu0 0
  %597 = vmatmul.mubr.bf16.gmra.mrb[0].mxu0 %v488
  %v598 = vpop.f32.mrb[0].mxu0
  %v599 = vadd.f32 0.0, %v598
  %v600 = vpop.f32.mrb[0].mxu0
  %v601 = vpop.f32.mrb[0].mxu0
  %v602 = vadd.f32 0.0, %v601
  %v603 = vpop.f32.mrb[0].mxu0
  %604 = vmatprep.mubr.bf16.mxu0 0
  %605 = vmatmul.mubr.bf16.gmra.mrb[0].mxu0 %v489
  %v606 = vpop.f32.mrb[0].mxu0
  %v607 = vadd.f32 0.0, %v606
  %v608 = vpop.f32.mrb[0].mxu0
  %v609 = vpop.f32.mrb[0].mxu0
  %v610 = vadd.f32 0.0, %v609
  %v611 = vpop.f32.mrb[0].mxu0
  %612 = vmatprep.mubr.bf16.mxu0 0
  %613 = vmatmul.mubr.bf16.gmra.mrb[0].mxu0 %v490
  %v614 = vpop.f32.mrb[0].mxu0
  %v615 = vadd.f32 0.0, %v614
  %v616 = vpop.f32.mrb[0].mxu0
  %v617 = vpop.f32.mrb[0].mxu0
  %v618 = vadd.f32 0.0, %v617
  %v619 = vpop.f32.mrb[0].mxu0
  %620 = vdwg.mxu0
  %v621 = vadd.f32 %v457, %v591
  %v622 = vadd.f32 %v460, %v594
  %v623 = vadd.f32 %v465, %v599
  %v624 = vadd.f32 %v468, %v602
  %v625 = vadd.f32 %v473, %v607
  %v626 = vadd.f32 %v476, %v610
  %v627 = vadd.f32 %v481, %v615
  %v628 = vadd.f32 %v484, %v618
  %v629 = vld [vmem:[%s4] sm:$0x1]
  %v631 = vlaneseq
  %v632 = vshrl.u32 %v631, 7
  %v633 = vsub.s32 0, %v632
  %v634 = vrot.slane %v629, %v633
  %v636 = vadd.f32 %v621, %v634
  %v637 = vadd.f32 %v622, %v634
  %v638 = vadd.f32 %v623, %v634
  %v639 = vadd.f32 %v624, %v634
  %v640 = vadd.f32 %v625, %v634
  %v641 = vadd.f32 %v626, %v634
  %v642 = vadd.f32 %v627, %v634
  %v643 = vadd.f32 %v628, %v634
  %v644 = vmax.f32 %v636, 0.0
  %v645 = vmax.f32 %v637, 0.0
  %v646 = vmax.f32 %v638, 0.0
  %v647 = vmax.f32 %v639, 0.0
  %v648 = vmax.f32 %v640, 0.0
  %v649 = vmax.f32 %v641, 0.0
  %v650 = vmax.f32 %v642, 0.0
  %v651 = vmax.f32 %v643, 0.0
  %v652 = vpack.c.bf16 %v645, %v644
  %v653 = vpack.c.bf16 %v647, %v646
  %v654 = vpack.c.bf16 %v649, %v648
  %v655 = vpack.c.bf16 %v651, %v650
  %v656 = vld [vmem:[%s5] sm:$0xf]
  %v657 = vld [vmem:[%s5 + $0x4] sm:$0xf]
  %v658 = vld [vmem:[%s5 + $0x8] sm:$0xf]
  %v659 = vld [vmem:[%s5 + $0xc] sm:$0xf]
  %v660 = vld [vmem:[%s5 + $0x10] sm:$0xf]
  %v661 = vld [vmem:[%s5 + $0x14] sm:$0xf]
  %v662 = vld [vmem:[%s5 + $0x18] sm:$0xf]
  %v663 = vld [vmem:[%s5 + $0x1c] sm:$0xf]
  %v664 = vld [vmem:[%s5 + $0x20] sm:$0xf]
  %v665 = vld [vmem:[%s5 + $0x24] sm:$0xf]
  %v666 = vld [vmem:[%s5 + $0x28] sm:$0xf]
  %v667 = vld [vmem:[%s5 + $0x2c] sm:$0xf]
  %v668 = vld [vmem:[%s5 + $0x30] sm:$0xf]
  %v669 = vld [vmem:[%s5 + $0x34] sm:$0xf]
  %v670 = vld [vmem:[%s5 + $0x38] sm:$0xf]
  %v671 = vld [vmem:[%s5 + $0x3c] sm:$0xf]
  %s672 = scalar_lea.vmem %s5, 64
  %v673 = vld [vmem:[%s672] sm:$0xf]
  %v674 = vld [vmem:[%s672 + $0x4] sm:$0xf]
  %v675 = vld [vmem:[%s672 + $0x8] sm:$0xf]
  %v676 = vld [vmem:[%s672 + $0xc] sm:$0xf]
  %v677 = vld [vmem:[%s672 + $0x10] sm:$0xf]
  %v678 = vld [vmem:[%s672 + $0x14] sm:$0xf]
  %v679 = vld [vmem:[%s672 + $0x18] sm:$0xf]
  %v680 = vld [vmem:[%s672 + $0x1c] sm:$0xf]
  %v681 = vld [vmem:[%s672 + $0x20] sm:$0xf]
  %v682 = vld [vmem:[%s672 + $0x24] sm:$0xf]
  %v683 = vld [vmem:[%s672 + $0x28] sm:$0xf]
  %v684 = vld [vmem:[%s672 + $0x2c] sm:$0xf]
  %v685 = vld [vmem:[%s672 + $0x30] sm:$0xf]
  %v686 = vld [vmem:[%s672 + $0x34] sm:$0xf]
  %v687 = vld [vmem:[%s672 + $0x38] sm:$0xf]
  %v688 = vld [vmem:[%s672 + $0x3c] sm:$0xf]
  %v705 = vunpack.c.l.b16 %v673
  %v706 = vunpack.c.l.b16 %v674
  %v707 = vunpack.c.l.b16 %v675
  %v708 = vunpack.c.l.b16 %v676
  %v709 = vunpack.c.l.b16 %v677
  %v710 = vunpack.c.l.b16 %v678
  %v711 = vunpack.c.l.b16 %v679
  %v712 = vunpack.c.l.b16 %v680
  %v713 = vunpack.c.l.b16 %v681
  %v714 = vunpack.c.l.b16 %v682
  %v715 = vunpack.c.l.b16 %v683
  %v716 = vunpack.c.l.b16 %v684
  %v717 = vunpack.c.l.b16 %v685
  %v718 = vunpack.c.l.b16 %v686
  %v719 = vunpack.c.l.b16 %v687
  %v720 = vunpack.c.l.b16 %v688
  %v721 = vpack.c.b16 %v706, %v705
  %v722 = vpack.c.b16 %v708, %v707
  %v723 = vpack.c.b16 %v710, %v709
  %v724 = vpack.c.b16 %v712, %v711
  %v725 = vpack.c.b16 %v714, %v713
  %v726 = vpack.c.b16 %v716, %v715
  %v727 = vpack.c.b16 %v718, %v717
  %v728 = vpack.c.b16 %v720, %v719
  %737 = vmatprep.subr.bf16.mxu0 0
  %738 = vmatpush1.bf16.msra.mxu0 %v721
  %739 = vmatprep.subr.bf16.mxu0 0
  %740 = vmatpush1.bf16.msra.mxu0 %v722
  %741 = vmatprep.subr.bf16.mxu0 0
  %742 = vmatpush1.bf16.msra.mxu0 %v723
  %743 = vmatprep.subr.bf16.mxu0 0
  %744 = vmatpush1.bf16.msra.mxu0 %v724
  %745 = vmatprep.subr.bf16.mxu0 0
  %746 = vmatpush1.bf16.msra.mxu0 %v725
  %747 = vmatprep.subr.bf16.mxu0 0
  %748 = vmatpush1.bf16.msra.mxu0 %v726
  %749 = vmatprep.subr.bf16.mxu0 0
  %750 = vmatpush1.bf16.msra.mxu0 %v727
  %751 = vmatprep.subr.bf16.mxu0 0
  %752 = vmatpush1.bf16.msra.mxu0 %v728
  %753 = vmatprep.subr.bf16.mxu0 0
  %754 = vmatpush1.bf16.msra.mxu0 0
  %755 = vmatprep.subr.bf16.mxu0 0
  %756 = vmatpush1.bf16.msra.mxu0 0
  %757 = vmatprep.subr.bf16.mxu0 0
  %758 = vmatpush1.bf16.msra.mxu0 0
  %759 = vmatprep.subr.bf16.mxu0 0
  %760 = vmatpush1.bf16.msra.mxu0 0
  %761 = vmatprep.subr.bf16.mxu0 0
  %762 = vmatpush1.bf16.msra.mxu0 0
  %763 = vmatprep.subr.bf16.mxu0 0
  %764 = vmatpush1.bf16.msra.mxu0 0
  %765 = vmatprep.subr.bf16.mxu0 0
  %766 = vmatpush1.bf16.msra.mxu0 0
  %767 = vmatprep.subr.bf16.mxu0 0
  %768 = vmatpush1.bf16.msra.mxu0 0
  %769 = vmatprep.mubr.bf16.mxu0 0
  %770 = vmatmul.mubr.bf16.gmra.mrb[0].mxu0 %v653
  %v771 = vpop.f32.mrb[0].mxu0
  %v772 = vadd.f32 0.0, %v771
  %v773 = vpop.f32.mrb[0].mxu0
  %v774 = vpop.f32.mrb[0].mxu0
  %v775 = vadd.f32 0.0, %v774
  %v776 = vpop.f32.mrb[0].mxu0
  %777 = vdwg.mxu0
  %v794 = vunpack.c.l.b16 %v656
  %v795 = vunpack.c.l.b16 %v657
  %v796 = vunpack.c.l.b16 %v658
  %v797 = vunpack.c.l.b16 %v659
  %v798 = vunpack.c.l.b16 %v660
  %v799 = vunpack.c.l.b16 %v661
  %v800 = vunpack.c.l.b16 %v662
  %v801 = vunpack.c.l.b16 %v663
  %v802 = vunpack.c.l.b16 %v664
  %v803 = vunpack.c.l.b16 %v665
  %v804 = vunpack.c.l.b16 %v666
  %v805 = vunpack.c.l.b16 %v667
  %v806 = vunpack.c.l.b16 %v668
  %v807 = vunpack.c.l.b16 %v669
  %v808 = vunpack.c.l.b16 %v670
  %v809 = vunpack.c.l.b16 %v671
  %v810 = vpack.c.b16 %v795, %v794
  %v811 = vpack.c.b16 %v797, %v796
  %v812 = vpack.c.b16 %v799, %v798
  %v813 = vpack.c.b16 %v801, %v800
  %v814 = vpack.c.b16 %v803, %v802
  %v815 = vpack.c.b16 %v805, %v804
  %v816 = vpack.c.b16 %v807, %v806
  %v817 = vpack.c.b16 %v809, %v808
  %826 = vmatprep.subr.bf16.mxu0 0
  %827 = vmatpush1.bf16.msra.mxu0 %v810
  %828 = vmatprep.subr.bf16.mxu0 0
  %829 = vmatpush1.bf16.msra.mxu0 %v811
  %830 = vmatprep.subr.bf16.mxu0 0
  %831 = vmatpush1.bf16.msra.mxu0 %v812
  %832 = vmatprep.subr.bf16.mxu0 0
  %833 = vmatpush1.bf16.msra.mxu0 %v813
  %834 = vmatprep.subr.bf16.mxu0 0
  %835 = vmatpush1.bf16.msra.mxu0 %v814
  %836 = vmatprep.subr.bf16.mxu0 0
  %837 = vmatpush1.bf16.msra.mxu0 %v815
  %838 = vmatprep.subr.bf16.mxu0 0
  %839 = vmatpush1.bf16.msra.mxu0 %v816
  %840 = vmatprep.subr.bf16.mxu0 0
  %841 = vmatpush1.bf16.msra.mxu0 %v817
  %842 = vmatprep.subr.bf16.mxu0 0
  %843 = vmatpush1.bf16.msra.mxu0 0
  %844 = vmatprep.subr.bf16.mxu0 0
  %845 = vmatpush1.bf16.msra.mxu0 0
  %846 = vmatprep.subr.bf16.mxu0 0
  %847 = vmatpush1.bf16.msra.mxu0 0
  %848 = vmatprep.subr.bf16.mxu0 0
  %849 = vmatpush1.bf16.msra.mxu0 0
  %850 = vmatprep.subr.bf16.mxu0 0
  %851 = vmatpush1.bf16.msra.mxu0 0
  %852 = vmatprep.subr.bf16.mxu0 0
  %853 = vmatpush1.bf16.msra.mxu0 0
  %854 = vmatprep.subr.bf16.mxu0 0
  %855 = vmatpush1.bf16.msra.mxu0 0
  %856 = vmatprep.subr.bf16.mxu0 0
  %857 = vmatpush1.bf16.msra.mxu0 0
  %858 = vmatprep.mubr.bf16.mxu0 0
  %859 = vmatmul.mubr.bf16.gmra.mrb[0].mxu0 %v652
  %v860 = vpop.f32.mrb[0].mxu0
  %v861 = vadd.f32 %v772, %v860
  %v862 = vpop.f32.mrb[0].mxu0
  %v863 = vpop.f32.mrb[0].mxu0
  %v864 = vadd.f32 %v775, %v863
  %v865 = vpop.f32.mrb[0].mxu0
  %866 = vdwg.mxu0
  %s867 = scalar_lea.vmem %s5, 128
  %v868 = vld [vmem:[%s867] sm:$0xf]
  %v869 = vld [vmem:[%s867 + $0x4] sm:$0xf]
  %v870 = vld [vmem:[%s867 + $0x8] sm:$0xf]
  %v871 = vld [vmem:[%s867 + $0xc] sm:$0xf]
  %v872 = vld [vmem:[%s867 + $0x10] sm:$0xf]
  %v873 = vld [vmem:[%s867 + $0x14] sm:$0xf]
  %v874 = vld [vmem:[%s867 + $0x18] sm:$0xf]
  %v875 = vld [vmem:[%s867 + $0x1c] sm:$0xf]
  %v876 = vld [vmem:[%s867 + $0x20] sm:$0xf]
  %v877 = vld [vmem:[%s867 + $0x24] sm:$0xf]
  %v878 = vld [vmem:[%s867 + $0x28] sm:$0xf]
  %v879 = vld [vmem:[%s867 + $0x2c] sm:$0xf]
  %v880 = vld [vmem:[%s867 + $0x30] sm:$0xf]
  %v881 = vld [vmem:[%s867 + $0x34] sm:$0xf]
  %v882 = vld [vmem:[%s867 + $0x38] sm:$0xf]
  %v883 = vld [vmem:[%s867 + $0x3c] sm:$0xf]
  %v900 = vunpack.c.l.b16 %v868
  %v901 = vunpack.c.l.b16 %v869
  %v902 = vunpack.c.l.b16 %v870
  %v903 = vunpack.c.l.b16 %v871
  %v904 = vunpack.c.l.b16 %v872
  %v905 = vunpack.c.l.b16 %v873
  %v906 = vunpack.c.l.b16 %v874
  %v907 = vunpack.c.l.b16 %v875
  %v908 = vunpack.c.l.b16 %v876
  %v909 = vunpack.c.l.b16 %v877
  %v910 = vunpack.c.l.b16 %v878
  %v911 = vunpack.c.l.b16 %v879
  %v912 = vunpack.c.l.b16 %v880
  %v913 = vunpack.c.l.b16 %v881
  %v914 = vunpack.c.l.b16 %v882
  %v915 = vunpack.c.l.b16 %v883
  %v916 = vpack.c.b16 %v901, %v900
  %v917 = vpack.c.b16 %v903, %v902
  %v918 = vpack.c.b16 %v905, %v904
  %v919 = vpack.c.b16 %v907, %v906
  %v920 = vpack.c.b16 %v909, %v908
  %v921 = vpack.c.b16 %v911, %v910
  %v922 = vpack.c.b16 %v913, %v912
  %v923 = vpack.c.b16 %v915, %v914
  %932 = vmatprep.subr.bf16.mxu0 0
  %933 = vmatpush1.bf16.msra.mxu0 %v916
  %934 = vmatprep.subr.bf16.mxu0 0
  %935 = vmatpush1.bf16.msra.mxu0 %v917
  %936 = vmatprep.subr.bf16.mxu0 0
  %937 = vmatpush1.bf16.msra.mxu0 %v918
  %938 = vmatprep.subr.bf16.mxu0 0
  %939 = vmatpush1.bf16.msra.mxu0 %v919
  %940 = vmatprep.subr.bf16.mxu0 0
  %941 = vmatpush1.bf16.msra.mxu0 %v920
  %942 = vmatprep.subr.bf16.mxu0 0
  %943 = vmatpush1.bf16.msra.mxu0 %v921
  %944 = vmatprep.subr.bf16.mxu0 0
  %945 = vmatpush1.bf16.msra.mxu0 %v922
  %946 = vmatprep.subr.bf16.mxu0 0
  %947 = vmatpush1.bf16.msra.mxu0 %v923
  %948 = vmatprep.subr.bf16.mxu0 0
  %949 = vmatpush1.bf16.msra.mxu0 0
  %950 = vmatprep.subr.bf16.mxu0 0
  %951 = vmatpush1.bf16.msra.mxu0 0
  %952 = vmatprep.subr.bf16.mxu0 0
  %953 = vmatpush1.bf16.msra.mxu0 0
  %954 = vmatprep.subr.bf16.mxu0 0
  %955 = vmatpush1.bf16.msra.mxu0 0
  %956 = vmatprep.subr.bf16.mxu0 0
  %957 = vmatpush1.bf16.msra.mxu0 0
  %958 = vmatprep.subr.bf16.mxu0 0
  %959 = vmatpush1.bf16.msra.mxu0 0
  %960 = vmatprep.subr.bf16.mxu0 0
  %961 = vmatpush1.bf16.msra.mxu0 0
  %962 = vmatprep.subr.bf16.mxu0 0
  %963 = vmatpush1.bf16.msra.mxu0 0
  %964 = vmatprep.mubr.bf16.mxu0 0
  %965 = vmatmul.mubr.bf16.gmra.mrb[0].mxu0 %v654
  %v966 = vpop.f32.mrb[0].mxu0
  %v967 = vadd.f32 0.0, %v966
  %v968 = vpop.f32.mrb[0].mxu0
  %v969 = vpop.f32.mrb[0].mxu0
  %v970 = vadd.f32 0.0, %v969
  %v971 = vpop.f32.mrb[0].mxu0
  %972 = vdwg.mxu0
  %v973 = vadd.f32 %v861, %v967
  %v974 = vadd.f32 %v864, %v970
  %s975 = scalar_lea.vmem %s5, 192
  %v976 = vld [vmem:[%s975] sm:$0xf]
  %v977 = vld [vmem:[%s975 + $0x4] sm:$0xf]
  %v978 = vld [vmem:[%s975 + $0x8] sm:$0xf]
  %v979 = vld [vmem:[%s975 + $0xc] sm:$0xf]
  %v980 = vld [vmem:[%s975 + $0x10] sm:$0xf]
  %v981 = vld [vmem:[%s975 + $0x14] sm:$0xf]
  %v982 = vld [vmem:[%s975 + $0x18] sm:$0xf]
  %v983 = vld [vmem:[%s975 + $0x1c] sm:$0xf]
  %v984 = vld [vmem:[%s975 + $0x20] sm:$0xf]
  %v985 = vld [vmem:[%s975 + $0x24] sm:$0xf]
  %v986 = vld [vmem:[%s975 + $0x28] sm:$0xf]
  %v987 = vld [vmem:[%s975 + $0x2c] sm:$0xf]
  %v988 = vld [vmem:[%s975 + $0x30] sm:$0xf]
  %v989 = vld [vmem:[%s975 + $0x34] sm:$0xf]
  %v990 = vld [vmem:[%s975 + $0x38] sm:$0xf]
  %v991 = vld [vmem:[%s975 + $0x3c] sm:$0xf]
  %v1008 = vunpack.c.l.b16 %v976
  %v1009 = vunpack.c.l.b16 %v977
  %v1010 = vunpack.c.l.b16 %v978
  %v1011 = vunpack.c.l.b16 %v979
  %v1012 = vunpack.c.l.b16 %v980
  %v1013 = vunpack.c.l.b16 %v981
  %v1014 = vunpack.c.l.b16 %v982
  %v1015 = vunpack.c.l.b16 %v983
  %v1016 = vunpack.c.l.b16 %v984
  %v1017 = vunpack.c.l.b16 %v985
  %v1018 = vunpack.c.l.b16 %v986
  %v1019 = vunpack.c.l.b16 %v987
  %v1020 = vunpack.c.l.b16 %v988
  %v1021 = vunpack.c.l.b16 %v989
  %v1022 = vunpack.c.l.b16 %v990
  %v1023 = vunpack.c.l.b16 %v991
  %v1024 = vpack.c.b16 %v1009, %v1008
  %v1025 = vpack.c.b16 %v1011, %v1010
  %v1026 = vpack.c.b16 %v1013, %v1012
  %v1027 = vpack.c.b16 %v1015, %v1014
  %v1028 = vpack.c.b16 %v1017, %v1016
  %v1029 = vpack.c.b16 %v1019, %v1018
  %v1030 = vpack.c.b16 %v1021, %v1020
  %v1031 = vpack.c.b16 %v1023, %v1022
  %1040 = vmatprep.subr.bf16.mxu0 0
  %1041 = vmatpush1.bf16.msra.mxu0 %v1024
  %1042 = vmatprep.subr.bf16.mxu0 0
  %1043 = vmatpush1.bf16.msra.mxu0 %v1025
  %1044 = vmatprep.subr.bf16.mxu0 0
  %1045 = vmatpush1.bf16.msra.mxu0 %v1026
  %1046 = vmatprep.subr.bf16.mxu0 0
  %1047 = vmatpush1.bf16.msra.mxu0 %v1027
  %1048 = vmatprep.subr.bf16.mxu0 0
  %1049 = vmatpush1.bf16.msra.mxu0 %v1028
  %1050 = vmatprep.subr.bf16.mxu0 0
  %1051 = vmatpush1.bf16.msra.mxu0 %v1029
  %1052 = vmatprep.subr.bf16.mxu0 0
  %1053 = vmatpush1.bf16.msra.mxu0 %v1030
  %1054 = vmatprep.subr.bf16.mxu0 0
  %1055 = vmatpush1.bf16.msra.mxu0 %v1031
  %1056 = vmatprep.subr.bf16.mxu0 0
  %1057 = vmatpush1.bf16.msra.mxu0 0
  %1058 = vmatprep.subr.bf16.mxu0 0
  %1059 = vmatpush1.bf16.msra.mxu0 0
  %1060 = vmatprep.subr.bf16.mxu0 0
  %1061 = vmatpush1.bf16.msra.mxu0 0
  %1062 = vmatprep.subr.bf16.mxu0 0
  %1063 = vmatpush1.bf16.msra.mxu0 0
  %1064 = vmatprep.subr.bf16.mxu0 0
  %1065 = vmatpush1.bf16.msra.mxu0 0
  %1066 = vmatprep.subr.bf16.mxu0 0
  %1067 = vmatpush1.bf16.msra.mxu0 0
  %1068 = vmatprep.subr.bf16.mxu0 0
  %1069 = vmatpush1.bf16.msra.mxu0 0
  %1070 = vmatprep.subr.bf16.mxu0 0
  %1071 = vmatpush1.bf16.msra.mxu0 0
  %1072 = vmatprep.mubr.bf16.mxu0 0
  %1073 = vmatmul.mubr.bf16.gmra.mrb[0].mxu0 %v655
  %v1074 = vpop.f32.mrb[0].mxu0
  %v1075 = vadd.f32 0.0, %v1074
  %v1076 = vpop.f32.mrb[0].mxu0
  %v1077 = vpop.f32.mrb[0].mxu0
  %v1078 = vadd.f32 0.0, %v1077
  %v1079 = vpop.f32.mrb[0].mxu0
  %1080 = vdwg.mxu0
  %v1081 = vadd.f32 %v973, %v1075
  %v1082 = vadd.f32 %v974, %v1078
  %v1083 = vld [vmem:[%s6] sm:$0x1]
  %v1085 = vlaneseq
  %v1086 = vshrl.u32 %v1085, 7
  %v1087 = vsub.s32 0, %v1086
  %v1088 = vrot.slane %v1083, %v1087
  %v1090 = vadd.f32 %v1081, %v1088
  %v1091 = vadd.f32 %v1082, %v1088
  %v1092 = vmax.f32 %v1090, 0.0
  %v1093 = vmax.f32 %v1091, 0.0
  %v1094 = vpack.c.bf16 %v1093, %v1092
  %v1095 = vld [vmem:[%s7] sm:$0xf]
  %v1096 = vld [vmem:[%s7 + $0x4] sm:$0xf]
  %v1097 = vld [vmem:[%s7 + $0x8] sm:$0xf]
  %v1098 = vld [vmem:[%s7 + $0xc] sm:$0xf]
  %v1099 = vld [vmem:[%s7 + $0x10] sm:$0xf]
  %v1100 = vld [vmem:[%s7 + $0x14] sm:$0xf]
  %v1101 = vld [vmem:[%s7 + $0x18] sm:$0xf]
  %v1102 = vld [vmem:[%s7 + $0x1c] sm:$0xf]
  %v1103 = vld [vmem:[%s7 + $0x20] sm:$0xf]
  %v1104 = vld [vmem:[%s7 + $0x24] sm:$0xf]
  %v1105 = vld [vmem:[%s7 + $0x28] sm:$0xf]
  %v1106 = vld [vmem:[%s7 + $0x2c] sm:$0xf]
  %v1107 = vld [vmem:[%s7 + $0x30] sm:$0xf]
  %v1108 = vld [vmem:[%s7 + $0x34] sm:$0xf]
  %v1109 = vld [vmem:[%s7 + $0x38] sm:$0xf]
  %v1110 = vld [vmem:[%s7 + $0x3c] sm:$0xf]
  %v1111 = vld [vmem:[%s8] sm:$0x1]
  %v1113 = vlaneseq
  %v1114 = vshrl.u32 %v1113, 7
  %v1115 = vsub.s32 0, %v1114
  %v1116 = vrot.slane %v1111, %v1115
  %v1134 = vunpack.c.l.b16 %v1095
  %v1135 = vunpack.c.l.b16 %v1096
  %v1136 = vunpack.c.l.b16 %v1097
  %v1137 = vunpack.c.l.b16 %v1098
  %v1138 = vunpack.c.l.b16 %v1099
  %v1139 = vunpack.c.l.b16 %v1100
  %v1140 = vunpack.c.l.b16 %v1101
  %v1141 = vunpack.c.l.b16 %v1102
  %v1142 = vunpack.c.l.b16 %v1103
  %v1143 = vunpack.c.l.b16 %v1104
  %v1144 = vunpack.c.l.b16 %v1105
  %v1145 = vunpack.c.l.b16 %v1106
  %v1146 = vunpack.c.l.b16 %v1107
  %v1147 = vunpack.c.l.b16 %v1108
  %v1148 = vunpack.c.l.b16 %v1109
  %v1149 = vunpack.c.l.b16 %v1110
  %v1150 = vpack.c.b16 %v1135, %v1134
  %v1151 = vpack.c.b16 %v1137, %v1136
  %v1152 = vpack.c.b16 %v1139, %v1138
  %v1153 = vpack.c.b16 %v1141, %v1140
  %v1154 = vpack.c.b16 %v1143, %v1142
  %v1155 = vpack.c.b16 %v1145, %v1144
  %v1156 = vpack.c.b16 %v1147, %v1146
  %v1157 = vpack.c.b16 %v1149, %v1148
  %1166 = vmatprep.subr.bf16.mxu0 0
  %1167 = vmatpush1.bf16.msra.mxu0 %v1150
  %1168 = vmatprep.subr.bf16.mxu0 0
  %1169 = vmatpush1.bf16.msra.mxu0 %v1151
  %1170 = vmatprep.subr.bf16.mxu0 0
  %1171 = vmatpush1.bf16.msra.mxu0 %v1152
  %1172 = vmatprep.subr.bf16.mxu0 0
  %1173 = vmatpush1.bf16.msra.mxu0 %v1153
  %1174 = vmatprep.subr.bf16.mxu0 0
  %1175 = vmatpush1.bf16.msra.mxu0 %v1154
  %1176 = vmatprep.subr.bf16.mxu0 0
  %1177 = vmatpush1.bf16.msra.mxu0 %v1155
  %1178 = vmatprep.subr.bf16.mxu0 0
  %1179 = vmatpush1.bf16.msra.mxu0 %v1156
  %1180 = vmatprep.subr.bf16.mxu0 0
  %1181 = vmatpush1.bf16.msra.mxu0 %v1157
  %1182 = vmatprep.subr.bf16.mxu0 0
  %1183 = vmatpush1.bf16.msra.mxu0 0
  %1184 = vmatprep.subr.bf16.mxu0 0
  %1185 = vmatpush1.bf16.msra.mxu0 0
  %1186 = vmatprep.subr.bf16.mxu0 0
  %1187 = vmatpush1.bf16.msra.mxu0 0
  %1188 = vmatprep.subr.bf16.mxu0 0
  %1189 = vmatpush1.bf16.msra.mxu0 0
  %1190 = vmatprep.subr.bf16.mxu0 0
  %1191 = vmatpush1.bf16.msra.mxu0 0
  %1192 = vmatprep.subr.bf16.mxu0 0
  %1193 = vmatpush1.bf16.msra.mxu0 0
  %1194 = vmatprep.subr.bf16.mxu0 0
  %1195 = vmatpush1.bf16.msra.mxu0 0
  %1196 = vmatprep.subr.bf16.mxu0 0
  %1197 = vmatpush1.bf16.msra.mxu0 0
  %1198 = vmatprep.mubr.bf16.mxu0 0
  %1199 = vmatmul.mubr.bf16.gmra.mrb[0].mxu0 %v1094
  %v1200 = vpop.f32.mrb[0].mxu0
  %v1201 = vadd.f32 %v1116, %v1200
  %v1202 = vpop.f32.mrb[0].mxu0
  %v1203 = vpop.f32.mrb[0].mxu0
  %v1204 = vadd.f32 %v1116, %v1203
  %v1205 = vpop.f32.mrb[0].mxu0
  %1206 = vdwg.mxu0
  %v1207 = vtanh.pop %v1201
  %v1208 = vtanh.pop %v1204
  %1209 = vst [vmem:[%s9] sm:$0xff] %v1207
  %1210 = vst [vmem:[%s9 + $0x8] sm:$0xff] %v1208
  // Predicated region
  $region42: #{encoder_aeris_forward.1} parent=0 // pred_check
    _
  $region43: #{encoder_aeris_forward.1} parent=0 // pred_check_branch
    %1212 = sbr.rel (0) target = $region45
  $region44: #{encoder_aeris_forward.1} parent=0 // pred_region
    _
  $region45: #{encoder_aeris_forward.1} parent=0 // pred_fallthru
    _
  // Predicated region
  $region46: #{encoder_aeris_forward.1} parent=0 // pred_check
    _
  $region47: #{encoder_aeris_forward.1} parent=0 // pred_check_branch
    %1214 = sbr.rel (0) target = $region49
  $region48: #{encoder_aeris_forward.1} parent=0 // pred_region
    _
  $region49: #{encoder_aeris_forward.1} parent=0 // pred_fallthru
    _

</llo_original>
